<compile_context>
chip_gen: v7x
topology: tpu7x:2x2x1
jax: 0.10.0
libtpu: 0.0.40
codegen_flags: <defaults>
</compile_context>

<pallas_src>
import jax
import jax.numpy as jnp
from jax.experimental import pallas as pl
from jax.experimental.pallas import tpu as pltpu


def _round_up(x, m):
    return ((x + m - 1) // m) * m


def _choose_tile(num_nodes, target=512):
    """Pick the node tile (lane dim of the transposed activations and both dims
    of the A_hat^K tile).  512 is the measured HBM-roofline sweet spot; the
    bf16 A tile is 0.5 MiB (x2 buffers), safe on v5e/v6e/v7x scoped VMEM."""
    n128 = _round_up(max(int(num_nodes), 1), 128)
    tile = min(target, n128)
    n_pad = _round_up(int(num_nodes), tile)
    # v7x shards the "parallel" column axis across its 2 TensorCores:
    # prefer >=2 column blocks when the padded node count allows it.
    if n_pad // tile < 2 and n_pad >= 256 and n_pad % 256 == 0:
        tile = n_pad // 2
    return n_pad, tile


# ---------------------------------------------------------------------------
# Fused kernel: propagation (h^T = x^T @ A_hat^K^T) + head (fc1+ReLU+fc2+lsm)
# ---------------------------------------------------------------------------
def _fused_kernel(xk_ref, a_ref, xj_ref, w1x_ref, w1h_ref, b1_ref,
                  w2_ref, b2_ref, o_ref, acc_ref):
    k = pl.program_id(1)

    @pl.when(k == 0)
    def _():
        acc_ref[...] = jnp.zeros_like(acc_ref)

    # Propagation partial sum: h^T[:, j] += x^T[:, k] @ A_hat^K^T[k, j]
    # bf16 operands, f32 accumulation; output columns (N) are lane-dense.
    acc_ref[...] += jnp.dot(xk_ref[...], a_ref[...],
                            preferred_element_type=jnp.float32)

    @pl.when(k == pl.num_programs(1) - 1)
    def _():
        h_bf = acc_ref[...].astype(jnp.bfloat16)                  # (F, tn)

        # fc1 on concat([x, conv]) with Wc folded into the bottom half:
        #   z^T = W1x @ x^T + (Wc@W1h) @ h^T + b1'      (f32 accum / epilogue)
        z = (jnp.dot(w1x_ref[...], xj_ref[...],
                     preferred_element_type=jnp.float32)
             + jnp.dot(w1h_ref[...], h_bf,
                       preferred_element_type=jnp.float32)
             + b1_ref[...])                                        # (H, tn)
        z = jnp.maximum(z, 0.0)                                    # ReLU (f32)

        # fc2 (class dim padded to 128 sublanes; padded bias = -1e30, f32 only)
        logits = (jnp.dot(w2_ref[...], z.astype(jnp.bfloat16),
                          preferred_element_type=jnp.float32)
                  + b2_ref[...])                                   # (Cpad, tn)

        # log_softmax over classes (axis 0), f32 epilogue.
        m = jnp.max(logits, axis=0, keepdims=True)
        shifted = logits - m
        lse = jnp.log(jnp.sum(jnp.exp(shifted), axis=0, keepdims=True))
        o_ref[...] = shifted - lse


# ---------------------------------------------------------------------------
# One-time (hoisted) graph / parameter preparation
# ---------------------------------------------------------------------------
def preprocess_graph(edge_index, num_nodes, K, *, tile_target=512):
    """Densify the edge list, build the GCN-normalized adjacency, raise it to
    the K-th power ONCE (static topology, SGConv(cached=True)), and store it
    transposed in bf16.  Returns ((A_hat^K)^T bf16, N_pad, tile)."""
    assert K >= 1
    n_pad, tile = _choose_tile(num_nodes, tile_target)
    src = edge_index[0]
    dst = edge_index[1]

    # A[target, source] = edge count (add_self_loops=False, per the module).
    adj = jnp.zeros((n_pad, n_pad), jnp.float32).at[dst, src].add(1.0)

    # PyG gcn_norm (no self loops): deg = in-degree of target; D^-1/2 both sides.
    deg = jnp.sum(adj, axis=1)
    dis = jnp.where(deg > 0, jax.lax.rsqrt(jnp.maximum(deg, 1e-12)), 0.0)
    a_hat = dis[:, None] * adj * dis[None, :]

    m = a_hat
    for _ in range(K - 1):            # A_hat^K in f32, single bf16 cast below
        m = m @ a_hat

    return m.T.astype(jnp.bfloat16), n_pad, tile


def prepare_params(params, n_classes, *, lane=128):
    """Fold Wc/bc into fc1's bottom half, transpose everything for the
    column-major (lane-dense) kernel, cast MXU operands to bf16, and pad fc2
    to a 128-wide class dimension (padded bias = -1e30, kept in f32)."""
    wc_t, bc, w1_t, b1, w2_t, b2 = params
    feat = wc_t.shape[0]
    hidden = w2_t.shape[0]
    c_pad = max(lane, _round_up(n_classes, lane))

    w1x = w1_t[:feat].T                     # (H, F)   acts on x^T
    w1h = (wc_t @ w1_t[feat:]).T            # (H, F)   Wc folded in, acts on h^T
    b1p = (bc @ w1_t[feat:] + b1).T         # (H, 1)   bc folded in

    w2p = jnp.zeros((c_pad, hidden), jnp.float32).at[:n_classes].set(w2_t.T)
    b2p = jnp.full((c_pad, 1), -1e30, jnp.float32).at[:n_classes].set(b2.T)

    return (w1x.astype(jnp.bfloat16),
            w1h.astype(jnp.bfloat16),
            b1p.astype(jnp.float32),
            w2p.astype(jnp.bfloat16),
            b2p)


# ---------------------------------------------------------------------------
# Forward pass
# ---------------------------------------------------------------------------
def model_sgconv_forward(nodes, graph, kparams, *, n_classes):
    """nodes: (N, F) f32;  graph: preprocess_graph(...);  kparams: prepare_params(...)."""
    akt, n_pad, tile = graph
    w1x, w1h, b1p, w2p, b2p = kparams
    N, feat = nodes.shape
    c_pad = w2p.shape[0]

    # Transposed, padded, bf16 node features: (F, N_pad), lane axis = nodes.
    xt = jnp.zeros((feat, n_pad), jnp.bfloat16).at[:, :N].set(
        nodes.T.astype(jnp.bfloat16))

    grid = (n_pad // tile, n_pad // tile)   # (column blocks j, reduction k)

    def full(arr):
        return pl.BlockSpec(arr.shape, lambda j, k: (0, 0))

    out_t = pl.pallas_call(
        _fused_kernel,
        out_shape=jax.ShapeDtypeStruct((c_pad, n_pad), jnp.float32),
        grid_spec=pltpu.PrefetchScalarGridSpec(
            num_scalar_prefetch=0,
            grid=grid,
            in_specs=[
                pl.BlockSpec((feat, tile), lambda j, k: (0, k)),   # x^T (reduction view)
                # (A_hat^K)^T tile; if its DMA is ever exposed at large N, add
                # pipeline_mode=pl.Buffered(3) here (ample VMEM headroom).
                pl.BlockSpec((tile, tile), lambda j, k: (k, j)),
                pl.BlockSpec((feat, tile), lambda j, k: (0, j)),   # x^T (head view)
                full(w1x), full(w1h), full(b1p), full(w2p), full(b2p),
            ],
            out_specs=pl.BlockSpec((c_pad, tile), lambda j, k: (0, j)),
            scratch_shapes=[pltpu.VMEM((feat, tile), jnp.float32)],  # h^T accumulator
        ),
        compiler_params=pltpu.CompilerParams(
            dimension_semantics=("parallel", "arbitrary")),
    )(xt, akt, xt, w1x, w1h, b1p, w2p, b2p)

    return out_t[:n_classes, :N].T


# ---------------------------------------------------------------------------
# Parameter init (PyTorch-Linear-style uniform bounds; weights stored (in, out))
# ---------------------------------------------------------------------------
def init_params(key, num_features, n_classes):
    feat = num_features
    hidden = feat                   # hidden_size = num_features
    fc_in = 2 * feat                # fcInputSize = num_features + num_features
    ks = jax.random.split(key, 6)

    def lin(kw, kb, fan_in, fan_out):
        bound = 1.0 / jnp.sqrt(fan_in)
        w_t = jax.random.uniform(kw, (fan_in, fan_out), jnp.float32, -bound, bound)
        b = jax.random.uniform(kb, (1, fan_out), jnp.float32, -bound, bound)
        return w_t, b

    wc_t, bc = lin(ks[0], ks[1], feat, feat)         # SGConv.lin (F -> F)
    w1_t, b1 = lin(ks[2], ks[3], fc_in, hidden)      # fc1 (2F -> H)
    w2_t, b2 = lin(ks[4], ks[5], hidden, n_classes)  # fc2 (H -> C)
    return (wc_t, bc, w1_t, b1, w2_t, b2)


# Pure-JAX f32 reference for validation.
def _reference_forward(nodes, edge_index, params, *, K):
    N, _ = nodes.shape
    src, dst = edge_index[0], edge_index[1]
    adj = jnp.zeros((N, N), jnp.float32).at[dst, src].add(1.0)
    deg = jnp.sum(adj, axis=1)
    dis = jnp.where(deg > 0, jax.lax.rsqrt(jnp.maximum(deg, 1e-12)), 0.0)
    a_hat = dis[:, None] * adj * dis[None, :]
    wc_t, bc, w1_t, b1, w2_t, b2 = params
    h = nodes
    for _ in range(K):
        h = a_hat @ h
    conv = h @ wc_t + bc
    z = jnp.maximum(jnp.concatenate([nodes, conv], axis=1) @ w1_t + b1, 0.0)
    logits = z @ w2_t + b2
    return jax.nn.log_softmax(logits, axis=1)


# TODO(synk): training utilities (Adam step, nll_loss, save/load) are not part of
# the forward pass and are not translated.

if __name__ == "__main__":
    N = 128            # number of graph nodes
    F = 32             # num_features
    C = 4              # nClasses
    K = 2              # SGConv propagation steps
    E = 512            # number of edges

    key = jax.random.PRNGKey(0)
    k_x, k_e_src, k_e_dst, k_p = jax.random.split(key, 4)

    nodes = jax.random.normal(k_x, (N, F), jnp.float32)
    edge_index = jnp.stack([
        jax.random.randint(k_e_src, (E,), 0, N, jnp.int32),
        jax.random.randint(k_e_dst, (E,), 0, N, jnp.int32),
    ], axis=0)

    params = init_params(k_p, F, C)

    # Hoisted, reusable preprocessing (static topology / static weights).
    graph = preprocess_graph(edge_index, N, K)
    kparams = prepare_params(params, C)

    out = model_sgconv_forward(nodes, graph, kparams, n_classes=C)
    out = jax.block_until_ready(out)

    assert out.shape == (N, C), out.shape
    assert bool(jnp.all(jnp.isfinite(out)))
    # log_softmax rows should exponentiate-sum to ~1
    assert bool(jnp.allclose(jnp.sum(jnp.exp(out), axis=1), 1.0, atol=1e-3))

    # Compare against a pure-JAX f32 reference (bf16 MXU operands => loose tol).
    ref = _reference_forward(nodes, edge_index, params, K=K)
    max_err = float(jnp.max(jnp.abs(out - ref)))
    assert max_err < 0.1, max_err

    print("KERNEL_OK")
</pallas_src>

<mosaic_0001>
module attributes {stable_mosaic.version = 11 : i64} {
  func.func @_fused_kernel(%arg0: i32, %arg1: i32, %arg2: memref<32x128xbf16, #tpu.memory_space<vmem>>, %arg3: memref<128x128xbf16, #tpu.memory_space<vmem>>, %arg4: memref<32x128xbf16, #tpu.memory_space<vmem>>, %arg5: memref<32x32xbf16, #tpu.memory_space<vmem>>, %arg6: memref<32x32xbf16, #tpu.memory_space<vmem>>, %arg7: memref<32x1xf32, #tpu.memory_space<vmem>>, %arg8: memref<128x32xbf16, #tpu.memory_space<vmem>>, %arg9: memref<128x1xf32, #tpu.memory_space<vmem>>, %arg10: memref<128x128xf32, #tpu.memory_space<vmem>>, %arg11: memref<32x128xf32, #tpu.memory_space<vmem>>) attributes {dimension_semantics = [#tpu.dimension_semantics<parallel>, #tpu.dimension_semantics<arbitrary>], iteration_bounds = array<i64: 1, 1>, scalar_prefetch = 0 : i64, scratch_operands = 1 : i64, tpu.core_type = #tpu.core_type<tc>, window_params = [{transform_indices = @transform_0, window_bounds = array<i64: 32, 128>}, {transform_indices = @transform_1, window_bounds = array<i64: 128, 128>}, {transform_indices = @transform_2, window_bounds = array<i64: 32, 128>}, {pipeline_mode = #tpu.pipeline_mode<synchronous>, transform_indices = @transform_3, window_bounds = array<i64: 32, 32>}, {pipeline_mode = #tpu.pipeline_mode<synchronous>, transform_indices = @transform_4, window_bounds = array<i64: 32, 32>}, {pipeline_mode = #tpu.pipeline_mode<synchronous>, transform_indices = @transform_5, window_bounds = array<i64: 32, 1>}, {pipeline_mode = #tpu.pipeline_mode<synchronous>, transform_indices = @transform_6, window_bounds = array<i64: 128, 32>}, {pipeline_mode = #tpu.pipeline_mode<synchronous>, transform_indices = @transform_7, window_bounds = array<i64: 128, 1>}, {transform_indices = @transform_8, window_bounds = array<i64: 128, 128>}]} {
    %c0_i32 = arith.constant 0 : i32
    %0 = arith.cmpi eq, %arg1, %c0_i32 : i32
    %1 = arith.extui %0 : i1 to i32
    %c0_i32_0 = arith.constant 0 : i32
    %2 = arith.cmpi ne, %1, %c0_i32_0 : i32
    scf.if %2 {
      %cst_10 = arith.constant 0.000000e+00 : f32
      %12 = vector.broadcast %cst_10 : f32 to vector<32x128xf32>
      %c0_11 = arith.constant 0 : index
      %c0_12 = arith.constant 0 : index
      %13 = vector.load %arg11[%c0_11, %c0_12] : memref<32x128xf32, #tpu.memory_space<vmem>>, vector<32x128xf32>
      tpu.vector_store %arg11[%c0_11, %c0_12], %12 {strides = array<i32>} : memref<32x128xf32, #tpu.memory_space<vmem>>, vector<32x128xf32>,
    } else {
    }
    %c0 = arith.constant 0 : index
    %c0_1 = arith.constant 0 : index
    %3 = vector.load %arg11[%c0, %c0_1] : memref<32x128xf32, #tpu.memory_space<vmem>>, vector<32x128xf32>
    %c0_2 = arith.constant 0 : index
    %c0_3 = arith.constant 0 : index
    %4 = vector.load %arg2[%c0_2, %c0_3] : memref<32x128xbf16, #tpu.memory_space<vmem>>, vector<32x128xbf16>
    %c0_4 = arith.constant 0 : index
    %c0_5 = arith.constant 0 : index
    %5 = vector.load %arg3[%c0_4, %c0_5] : memref<128x128xbf16, #tpu.memory_space<vmem>>, vector<128x128xbf16>
    %cst = arith.constant dense<0.000000e+00> : vector<32x128xf32>
    %6 = tpu.matmul %4, %5, %cst {dimension_numbers = #tpu.dot_dimension_numbers<[1], [0], [0], [1], [0, 0, 1, 1], [], []>} : vector<32x128xbf16>, vector<128x128xbf16>, vector<32x128xf32> -> vector<32x128xf32>
    %7 = arith.addf %3, %6 : vector<32x128xf32>
    %c0_6 = arith.constant 0 : index
    %c0_7 = arith.constant 0 : index
    %8 = vector.load %arg11[%c0_6, %c0_7] : memref<32x128xf32, #tpu.memory_space<vmem>>, vector<32x128xf32>
    tpu.vector_store %arg11[%c0_6, %c0_7], %7 {strides = array<i32>} : memref<32x128xf32, #tpu.memory_space<vmem>>, vector<32x128xf32>,
    %c0_i32_8 = arith.constant 0 : i32
    %9 = arith.cmpi eq, %arg1, %c0_i32_8 : i32
    %10 = arith.extui %9 : i1 to i32
    %c0_i32_9 = arith.constant 0 : i32
    %11 = arith.cmpi ne, %10, %c0_i32_9 : i32
    scf.if %11 {
      %c0_10 = arith.constant 0 : index
      %c0_11 = arith.constant 0 : index
      %12 = vector.load %arg11[%c0_10, %c0_11] : memref<32x128xf32, #tpu.memory_space<vmem>>, vector<32x128xf32>
      %13 = arith.truncf %12 : vector<32x128xf32> to vector<32x128xbf16>
      %c0_12 = arith.constant 0 : index
      %c0_13 = arith.constant 0 : index
      %14 = vector.load %arg5[%c0_12, %c0_13] : memref<32x32xbf16, #tpu.memory_space<vmem>>, vector<32x32xbf16>
      %c0_14 = arith.constant 0 : index
      %c0_15 = arith.constant 0 : index
      %15 = vector.load %arg4[%c0_14, %c0_15] : memref<32x128xbf16, #tpu.memory_space<vmem>>, vector<32x128xbf16>
      %cst_16 = arith.constant dense<0.000000e+00> : vector<32x128xf32>
      %16 = tpu.matmul %14, %15, %cst_16 {dimension_numbers = #tpu.dot_dimension_numbers<[1], [0], [0], [1], [0, 0, 1, 1], [], []>} : vector<32x32xbf16>, vector<32x128xbf16>, vector<32x128xf32> -> vector<32x128xf32>
      %c0_17 = arith.constant 0 : index
      %c0_18 = arith.constant 0 : index
      %17 = vector.load %arg6[%c0_17, %c0_18] : memref<32x32xbf16, #tpu.memory_space<vmem>>, vector<32x32xbf16>
      %cst_19 = arith.constant dense<0.000000e+00> : vector<32x128xf32>
      %18 = tpu.matmul %17, %13, %cst_19 {dimension_numbers = #tpu.dot_dimension_numbers<[1], [0], [0], [1], [0, 0, 1, 1], [], []>} : vector<32x32xbf16>, vector<32x128xbf16>, vector<32x128xf32> -> vector<32x128xf32>
      %19 = arith.addf %16, %18 : vector<32x128xf32>
      %c0_20 = arith.constant 0 : index
      %c0_21 = arith.constant 0 : index
      %20 = vector.load %arg7[%c0_20, %c0_21] : memref<32x1xf32, #tpu.memory_space<vmem>>, vector<32x1xf32>
      %21 = vector.broadcast %20 : vector<32x1xf32> to vector<32x128xf32>
      %22 = arith.addf %19, %21 : vector<32x128xf32>
      %cst_22 = arith.constant 0.000000e+00 : f32
      %23 = vector.broadcast %cst_22 : f32 to vector<32x128xf32>
      %24 = arith.maximumf %22, %23 : vector<32x128xf32>
      %c0_23 = arith.constant 0 : index
      %c0_24 = arith.constant 0 : index
      %25 = vector.load %arg8[%c0_23, %c0_24] : memref<128x32xbf16, #tpu.memory_space<vmem>>, vector<128x32xbf16>
      %26 = arith.truncf %24 : vector<32x128xf32> to vector<32x128xbf16>
      %cst_25 = arith.constant dense<0.000000e+00> : vector<128x128xf32>
      %27 = tpu.matmul %25, %26, %cst_25 {dimension_numbers = #tpu.dot_dimension_numbers<[1], [0], [0], [1], [0, 0, 1, 1], [], []>} : vector<128x32xbf16>, vector<32x128xbf16>, vector<128x128xf32> -> vector<128x128xf32>
      %c0_26 = arith.constant 0 : index
      %c0_27 = arith.constant 0 : index
      %28 = vector.load %arg9[%c0_26, %c0_27] : memref<128x1xf32, #tpu.memory_space<vmem>>, vector<128x1xf32>
      %29 = vector.broadcast %28 : vector<128x1xf32> to vector<128x128xf32>
      %30 = arith.addf %27, %29 : vector<128x128xf32>
      %cst_28 = arith.constant dense<0xFF800000> : vector<128xf32>
      %31 = vector.multi_reduction <maximumf>, %30, %cst_28 [0] : vector<128x128xf32> to vector<128xf32>
      %32 = vector.shape_cast %31 : vector<128xf32> to vector<1x128xf32>
      %33 = vector.broadcast %32 : vector<1x128xf32> to vector<128x128xf32>
      %34 = arith.subf %30, %33 : vector<128x128xf32>
      %35 = math.exp %34 : vector<128x128xf32>
      %cst_29 = arith.constant dense<0.000000e+00> : vector<128xf32>
      %36 = vector.multi_reduction <add>, %35, %cst_29 [0] : vector<128x128xf32> to vector<128xf32>
      %37 = vector.shape_cast %36 : vector<128xf32> to vector<1x128xf32>
      %38 = math.log %37 : vector<1x128xf32>
      %39 = vector.broadcast %38 : vector<1x128xf32> to vector<128x128xf32>
      %40 = arith.subf %34, %39 : vector<128x128xf32>
      %c0_30 = arith.constant 0 : index
      %c0_31 = arith.constant 0 : index
      %41 = vector.load %arg10[%c0_30, %c0_31] : memref<128x128xf32, #tpu.memory_space<vmem>>, vector<128x128xf32>
      tpu.vector_store %arg10[%c0_30, %c0_31], %40 {strides = array<i32>} : memref<128x128xf32, #tpu.memory_space<vmem>>, vector<128x128xf32>,
    } else {
    }
    return
  }
  func.func @transform_0(%arg0: i32, %arg1: i32) -> (i32, i32) {
    %c0_i32 = arith.constant 0 : i32
    %c0_i32_0 = arith.constant 0 : i32
    return %c0_i32, %arg1 : i32, i32
  }
  func.func @transform_1(%arg0: i32, %arg1: i32) -> (i32, i32) {
    %c0_i32 = arith.constant 0 : i32
    return %arg1, %arg0 : i32, i32
  }
  func.func @transform_2(%arg0: i32, %arg1: i32) -> (i32, i32) {
    %c0_i32 = arith.constant 0 : i32
    %c0_i32_0 = arith.constant 0 : i32
    return %c0_i32, %arg0 : i32, i32
  }
  func.func @transform_3(%arg0: i32, %arg1: i32) -> (i32, i32) {
    %c0_i32 = arith.constant 0 : i32
    %c0_i32_0 = arith.constant 0 : i32
    %c0_i32_1 = arith.constant 0 : i32
    return %c0_i32, %c0_i32_0 : i32, i32
  }
  func.func @transform_4(%arg0: i32, %arg1: i32) -> (i32, i32) {
    %c0_i32 = arith.constant 0 : i32
    %c0_i32_0 = arith.constant 0 : i32
    %c0_i32_1 = arith.constant 0 : i32
    return %c0_i32, %c0_i32_0 : i32, i32
  }
  func.func @transform_5(%arg0: i32, %arg1: i32) -> (i32, i32) {
    %c0_i32 = arith.constant 0 : i32
    %c0_i32_0 = arith.constant 0 : i32
    %c0_i32_1 = arith.constant 0 : i32
    return %c0_i32, %c0_i32_0 : i32, i32
  }
  func.func @transform_6(%arg0: i32, %arg1: i32) -> (i32, i32) {
    %c0_i32 = arith.constant 0 : i32
    %c0_i32_0 = arith.constant 0 : i32
    %c0_i32_1 = arith.constant 0 : i32
    return %c0_i32, %c0_i32_0 : i32, i32
  }
  func.func @transform_7(%arg0: i32, %arg1: i32) -> (i32, i32) {
    %c0_i32 = arith.constant 0 : i32
    %c0_i32_0 = arith.constant 0 : i32
    %c0_i32_1 = arith.constant 0 : i32
    return %c0_i32, %c0_i32_0 : i32, i32
  }
  func.func @transform_8(%arg0: i32, %arg1: i32) -> (i32, i32) {
    %c0_i32 = arith.constant 0 : i32
    %c0_i32_0 = arith.constant 0 : i32
    return %c0_i32, %arg0 : i32, i32
  }
}

</mosaic_0001>

<llo_original>
// kernel: tpu_custom_call.1
$region0: #{tpu_custom_call.1}
  #allocation0 [shape = 'u32[]', space=smem, size = 0x4, offset = 0x4, fixed_abs, tag = 'smem constant byte address 0x4 - core index']
  #allocation1 [shape = 'u32[144,128]{1,0:T(1,128)}', space=vmem, size = 0x12000, scoped, tag = 'internal scratch']
  #allocation2 [shape = 'f32[32,128]{1,0:T(8,128)}', space=vmem, size = 0x4000, scoped, tag = 'scratch operand']
  %s0 = inlined_call_operand.vmem [shape: bf16[32,128], index: 0, kind: input, shape index: {}]
  %s1 = inlined_call_operand.vmem [shape: bf16[128,128], index: 1, kind: input, shape index: {}]
  %s2 = inlined_call_operand.vmem [shape: bf16[32,128], index: 2, kind: input, shape index: {}]
  %s3 = inlined_call_operand.vmem [shape: bf16[32,32], index: 3, kind: input, shape index: {}]
  %s4 = inlined_call_operand.vmem [shape: bf16[32,32], index: 4, kind: input, shape index: {}]
  %s5 = inlined_call_operand.vmem [shape: f32[32,1], index: 5, kind: input, shape index: {}]
  %s6 = inlined_call_operand.vmem [shape: bf16[128,32], index: 6, kind: input, shape index: {}]
  %s7 = inlined_call_operand.vmem [shape: f32[128,1], index: 7, kind: input, shape index: {}]
  %s8 = inlined_call_operand.hbm [shape: f32[128,128], index: 8, kind: output, shape index: {}]
  %s9 = sld [smem:[#allocation0]]
  $region50: #{tpu_custom_call.1} parent=0
    _
  %s11 = ssub.s32 1, %s9
  %s12 = scalar_select 0, %s11, %s9
  $region1: #{tpu_custom_call.1} parent=0
    #allocation3 [shape = 'u8[65536]{0}', space=vmem, size = 0x10000, scoped, tag = 'output window, operand 0, single buffered']
    #allocation4 [shape = 's32[1]{0}', space=sflag, size = 0x4, scoped, tag = 'scoped memory for tpu_custom_call.1']
    %13 = vsyncpa [#allocation4], 0
    // Predicated region
    $region2: #{tpu_custom_call.1} parent=1 // pred_check
      _
    $region3: #{tpu_custom_call.1} parent=1 // pred_check_branch
      %15 = sbr.rel (0) target = $region5
    $region4: #{tpu_custom_call.1} parent=1 // pred_region
      _
    $region5: #{tpu_custom_call.1} parent=1 // pred_fallthru
      _
    // Predicated region
    $region6: #{tpu_custom_call.1} parent=1 // pred_check
      _
    $region7: #{tpu_custom_call.1} parent=1 // pred_check_branch
      %17 = sbr.rel (0) target = $region9
    $region8: #{tpu_custom_call.1} parent=1 // pred_region
      _
    $region9: #{tpu_custom_call.1} parent=1 // pred_fallthru
      _
    // Predicated region
    $region10: #{tpu_custom_call.1} parent=1 // pred_check
      _
    $region11: #{tpu_custom_call.1} parent=1 // pred_check_branch
      %19 = sbr.rel (0) target = $region13
    $region12: #{tpu_custom_call.1} parent=1 // pred_region
      _
    $region13: #{tpu_custom_call.1} parent=1 // pred_fallthru
      _
    // Predicated region
    $region14: #{tpu_custom_call.1} parent=1 // pred_check
      _
    $region15: #{tpu_custom_call.1} parent=1 // pred_check_branch
      %21 = sbr.rel (0) target = $region17
    $region16: #{tpu_custom_call.1} parent=1 // pred_region
      _
    $region17: #{tpu_custom_call.1} parent=1 // pred_fallthru
      _
    // Predicated region
    $region18: #{tpu_custom_call.1} parent=1 // pred_check
      _
    $region19: #{tpu_custom_call.1} parent=1 // pred_check_branch
      %23 = sbr.rel (0) target = $region21
    $region20: #{tpu_custom_call.1} parent=1 // pred_region
      _
    $region21: #{tpu_custom_call.1} parent=1 // pred_fallthru
      _
    // Predicated region
    $region22: #{tpu_custom_call.1} parent=1 // pred_check
      _
    $region23: #{tpu_custom_call.1} parent=1 // pred_check_branch
      %25 = sbr.rel (0) target = $region25
    $region24: #{tpu_custom_call.1} parent=1 // pred_region
      _
    $region25: #{tpu_custom_call.1} parent=1 // pred_fallthru
      _
    // Predicated region
    $region26: #{tpu_custom_call.1} parent=1 // pred_check
      _
    $region27: #{tpu_custom_call.1} parent=1 // pred_check_branch
      %27 = sbr.rel (0) target = $region29
    $region28: #{tpu_custom_call.1} parent=1 // pred_region
      _
    $region29: #{tpu_custom_call.1} parent=1 // pred_fallthru
      _
    // Predicated region
    $region30: #{tpu_custom_call.1} parent=1 // pred_check
      _
    $region31: #{tpu_custom_call.1} parent=1 // pred_check_branch
      %29 = sbr.rel (0) target = $region33
    $region32: #{tpu_custom_call.1} parent=1 // pred_region
      _
    $region33: #{tpu_custom_call.1} parent=1 // pred_fallthru
      _
    %p31 = scmp.eq.s32.totalorder 0, 0
    // Predicated region
    $region34: #{tpu_custom_call.1} parent=1 // pred_check
      %p32 = pneg %p31
    $region35: #{tpu_custom_call.1} parent=1 // pred_check_branch
      %34 = sbr.rel (%p32) target = $region37
    $region36: #{tpu_custom_call.1} parent=1 // pred_region
      %35 = vst [vmem:[#allocation2] sm:$0xff] 0.0
      %36 = vst [vmem:[#allocation2 + $0x8] sm:$0xff] 0.0
      %37 = vst [vmem:[#allocation2 + $0x10] sm:$0xff] 0.0
      %38 = vst [vmem:[#allocation2 + $0x18] sm:$0xff] 0.0
    $region37: #{tpu_custom_call.1} parent=1 // pred_fallthru
      _
    %v39 = vld [vmem:[#allocation2] sm:$0xff]
    %v40 = vld [vmem:[#allocation2 + $0x8] sm:$0xff]
    %v41 = vld [vmem:[#allocation2 + $0x10] sm:$0xff]
    %v42 = vld [vmem:[#allocation2 + $0x18] sm:$0xff]
    %v43 = vld [vmem:[%s0] sm:$0xf]
    %v44 = vld [vmem:[%s0 + $0x4] sm:$0xf]
    %v45 = vld [vmem:[%s0 + $0x8] sm:$0xf]
    %v46 = vld [vmem:[%s0 + $0xc] sm:$0xf]
    %v47 = vld [vmem:[%s1] sm:$0xf]
    %v48 = vld [vmem:[%s1 + $0x4] sm:$0xf]
    %v49 = vld [vmem:[%s1 + $0x8] sm:$0xf]
    %v50 = vld [vmem:[%s1 + $0xc] sm:$0xf]
    %v51 = vld [vmem:[%s1 + $0x10] sm:$0xf]
    %v52 = vld [vmem:[%s1 + $0x14] sm:$0xf]
    %v53 = vld [vmem:[%s1 + $0x18] sm:$0xf]
    %v54 = vld [vmem:[%s1 + $0x1c] sm:$0xf]
    %v55 = vld [vmem:[%s1 + $0x20] sm:$0xf]
    %v56 = vld [vmem:[%s1 + $0x24] sm:$0xf]
    %v57 = vld [vmem:[%s1 + $0x28] sm:$0xf]
    %v58 = vld [vmem:[%s1 + $0x2c] sm:$0xf]
    %v59 = vld [vmem:[%s1 + $0x30] sm:$0xf]
    %v60 = vld [vmem:[%s1 + $0x34] sm:$0xf]
    %v61 = vld [vmem:[%s1 + $0x38] sm:$0xf]
    %v62 = vld [vmem:[%s1 + $0x3c] sm:$0xf]
    %v67 = vunpack.c.l.b16 %v43
    %v68 = vunpack.c.l.b16 %v44
    %v69 = vunpack.c.l.b16 %v45
    %v70 = vunpack.c.l.b16 %v46
    %v71 = vpack.c.b16 %v68, %v67
    %v72 = vpack.c.b16 %v70, %v69
    %v91 = vunpack.c.l.b16 %v47
    %v92 = vunpack.c.l.b16 %v48
    %v93 = vunpack.c.l.b16 %v49
    %v94 = vunpack.c.l.b16 %v50
    %v95 = vunpack.c.l.b16 %v51
    %v96 = vunpack.c.l.b16 %v52
    %v97 = vunpack.c.l.b16 %v53
    %v98 = vunpack.c.l.b16 %v54
    %v99 = vunpack.c.l.b16 %v55
    %v100 = vunpack.c.l.b16 %v56
    %v101 = vunpack.c.l.b16 %v57
    %v102 = vunpack.c.l.b16 %v58
    %v103 = vunpack.c.l.b16 %v59
    %v104 = vunpack.c.l.b16 %v60
    %v105 = vunpack.c.l.b16 %v61
    %v106 = vunpack.c.l.b16 %v62
    %v107 = vpack.c.b16 %v92, %v91
    %v108 = vpack.c.b16 %v94, %v93
    %v109 = vpack.c.b16 %v96, %v95
    %v110 = vpack.c.b16 %v98, %v97
    %v111 = vpack.c.b16 %v100, %v99
    %v112 = vpack.c.b16 %v102, %v101
    %v113 = vpack.c.b16 %v104, %v103
    %v114 = vpack.c.b16 %v106, %v105
    %123 = vmatprep.subr.bf16.mxu0 0
    %124 = vmatpush1.bf16.msra.mxu0 %v107
    %125 = vmatprep.subr.bf16.mxu0 0
    %126 = vmatpush1.bf16.msra.mxu0 %v108
    %127 = vmatprep.subr.bf16.mxu0 0
    %128 = vmatpush1.bf16.msra.mxu0 %v109
    %129 = vmatprep.subr.bf16.mxu0 0
    %130 = vmatpush1.bf16.msra.mxu0 %v110
    %131 = vmatprep.subr.bf16.mxu0 0
    %132 = vmatpush1.bf16.msra.mxu0 %v111
    %133 = vmatprep.subr.bf16.mxu0 0
    %134 = vmatpush1.bf16.msra.mxu0 %v112
    %135 = vmatprep.subr.bf16.mxu0 0
    %136 = vmatpush1.bf16.msra.mxu0 %v113
    %137 = vmatprep.subr.bf16.mxu0 0
    %138 = vmatpush1.bf16.msra.mxu0 %v114
    %139 = vmatprep.subr.bf16.mxu0 0
    %140 = vmatpush1.bf16.msra.mxu0 0
    %141 = vmatprep.subr.bf16.mxu0 0
    %142 = vmatpush1.bf16.msra.mxu0 0
    %143 = vmatprep.subr.bf16.mxu0 0
    %144 = vmatpush1.bf16.msra.mxu0 0
    %145 = vmatprep.subr.bf16.mxu0 0
    %146 = vmatpush1.bf16.msra.mxu0 0
    %147 = vmatprep.subr.bf16.mxu0 0
    %148 = vmatpush1.bf16.msra.mxu0 0
    %149 = vmatprep.subr.bf16.mxu0 0
    %150 = vmatpush1.bf16.msra.mxu0 0
    %151 = vmatprep.subr.bf16.mxu0 0
    %152 = vmatpush1.bf16.msra.mxu0 0
    %153 = vmatprep.subr.bf16.mxu0 0
    %154 = vmatpush1.bf16.msra.mxu0 0
    %155 = vmatprep.mubr.bf16.mxu0 0
    %156 = vmatmul.mubr.bf16.gmra.mrb[0].mxu0 %v71
    %v157 = vpop.f32.mrb[0].mxu0
    %v158 = vadd.f32 0.0, %v157
    %v159 = vpop.f32.mrb[0].mxu0
    %v160 = vpop.f32.mrb[0].mxu0
    %v161 = vadd.f32 0.0, %v160
    %v162 = vpop.f32.mrb[0].mxu0
    %163 = vmatprep.mubr.bf16.mxu0 0
    %164 = vmatmul.mubr.bf16.gmra.mrb[0].mxu0 %v72
    %v165 = vpop.f32.mrb[0].mxu0
    %v166 = vadd.f32 0.0, %v165
    %v167 = vpop.f32.mrb[0].mxu0
    %v168 = vpop.f32.mrb[0].mxu0
    %v169 = vadd.f32 0.0, %v168
    %v170 = vpop.f32.mrb[0].mxu0
    %171 = vdwg.mxu0
    %v172 = vadd.f32 %v39, %v158
    %v173 = vadd.f32 %v40, %v161
    %v174 = vadd.f32 %v41, %v166
    %v175 = vadd.f32 %v42, %v169
    %176 = vst [vmem:[#allocation2] sm:$0xff] %v172
    %177 = vst [vmem:[#allocation2 + $0x8] sm:$0xff] %v173
    %178 = vst [vmem:[#allocation2 + $0x10] sm:$0xff] %v174
    %179 = vst [vmem:[#allocation2 + $0x18] sm:$0xff] %v175
    // Predicated region
    $region38: #{tpu_custom_call.1} parent=1 // pred_check
      %p180 = pneg %p31
    $region39: #{tpu_custom_call.1} parent=1 // pred_check_branch
      %182 = sbr.rel (%p180) target = $region41
    $region40: #{tpu_custom_call.1} parent=1 // pred_region
      %v183 = vld [vmem:[#allocation2] sm:$0xff]
      %v184 = vld [vmem:[#allocation2 + $0x8] sm:$0xff]
      %v185 = vld [vmem:[#allocation2 + $0x10] sm:$0xff]
      %v186 = vld [vmem:[#allocation2 + $0x18] sm:$0xff]
      %v187 = vpack.c.bf16 %v184, %v183
      %v188 = vpack.c.bf16 %v186, %v185
      %v189 = vld [vmem:[%s3] sm:$0xf]
      %v190 = vld [vmem:[%s3 + $0x4] sm:$0xf]
      %v191 = vld [vmem:[%s3 + $0x8] sm:$0xf]
      %v192 = vld [vmem:[%s3 + $0xc] sm:$0xf]
      %v193 = vld [vmem:[%s2] sm:$0xf]
      %v194 = vld [vmem:[%s2 + $0x4] sm:$0xf]
      %v195 = vld [vmem:[%s2 + $0x8] sm:$0xf]
      %v196 = vld [vmem:[%s2 + $0xc] sm:$0xf]
      %v197 = vld [vmem:[%s4] sm:$0xf]
      %v198 = vld [vmem:[%s4 + $0x4] sm:$0xf]
      %v199 = vld [vmem:[%s4 + $0x8] sm:$0xf]
      %v200 = vld [vmem:[%s4 + $0xc] sm:$0xf]
      %v205 = vunpack.c.l.b16 %v197
      %v206 = vunpack.c.l.b16 %v198
      %v207 = vunpack.c.l.b16 %v199
      %v208 = vunpack.c.l.b16 %v200
      %v209 = vpack.c.b16 %v206, %v205
      %v210 = vpack.c.b16 %v208, %v207
      %vm211 = vcmask 261120
      %v213 = vsel %vm211, %v209, 0
      %v216 = vsel %vm211, %v210, 0
      %218 = vmatprep.subr.bf16.mxu0 0
      %219 = vmatpush1.bf16.msra.mxu0 %v187
      %220 = vmatprep.subr.bf16.mxu0 0
      %221 = vmatpush1.bf16.msra.mxu0 %v188
      %222 = vmatprep.subr.bf16.mxu0 0
      %223 = vmatpush1.bf16.msra.mxu0 0
      %224 = vmatprep.subr.bf16.mxu0 0
      %225 = vmatpush1.bf16.msra.mxu0 0
      %226 = vmatprep.subr.bf16.mxu0 0
      %227 = vmatpush1.bf16.msra.mxu0 0
      %228 = vmatprep.subr.bf16.mxu0 0
      %229 = vmatpush1.bf16.msra.mxu0 0
      %230 = vmatprep.subr.bf16.mxu0 0
      %231 = vmatpush1.bf16.msra.mxu0 0
      %232 = vmatprep.subr.bf16.mxu0 0
      %233 = vmatpush1.bf16.msra.mxu0 0
      %234 = vmatprep.subr.bf16.mxu0 0
      %235 = vmatpush1.bf16.msra.mxu0 0
      %236 = vmatprep.subr.bf16.mxu0 0
      %237 = vmatpush1.bf16.msra.mxu0 0
      %238 = vmatprep.subr.bf16.mxu0 0
      %239 = vmatpush1.bf16.msra.mxu0 0
      %240 = vmatprep.subr.bf16.mxu0 0
      %241 = vmatpush1.bf16.msra.mxu0 0
      %242 = vmatprep.subr.bf16.mxu0 0
      %243 = vmatpush1.bf16.msra.mxu0 0
      %244 = vmatprep.subr.bf16.mxu0 0
      %245 = vmatpush1.bf16.msra.mxu0 0
      %246 = vmatprep.subr.bf16.mxu0 0
      %247 = vmatpush1.bf16.msra.mxu0 0
      %248 = vmatprep.subr.bf16.mxu0 0
      %249 = vmatpush1.bf16.msra.mxu0 0
      %250 = vmatprep.mubr.bf16.mxu0 0
      %251 = vmatmul.mubr.bf16.gmra.mrb[0].mxu0 %v213
      %v252 = vpop.f32.mrb[0].mxu0
      %v253 = vadd.f32 0.0, %v252
      %v254 = vpop.f32.mrb[0].mxu0
      %v255 = vpop.f32.mrb[0].mxu0
      %v256 = vadd.f32 0.0, %v255
      %v257 = vpop.f32.mrb[0].mxu0
      %258 = vmatprep.mubr.bf16.mxu0 0
      %259 = vmatmul.mubr.bf16.gmra.mrb[0].mxu0 %v216
      %v260 = vpop.f32.mrb[0].mxu0
      %v261 = vadd.f32 0.0, %v260
      %v262 = vpop.f32.mrb[0].mxu0
      %v263 = vpop.f32.mrb[0].mxu0
      %v264 = vadd.f32 0.0, %v263
      %v265 = vpop.f32.mrb[0].mxu0
      %266 = vdwg.mxu0
      %v271 = vunpack.c.l.b16 %v189
      %v272 = vunpack.c.l.b16 %v190
      %v273 = vunpack.c.l.b16 %v191
      %v274 = vunpack.c.l.b16 %v192
      %v275 = vpack.c.b16 %v272, %v271
      %v276 = vpack.c.b16 %v274, %v273
      %v281 = vunpack.c.l.b16 %v193
      %v282 = vunpack.c.l.b16 %v194
      %v283 = vunpack.c.l.b16 %v195
      %v284 = vunpack.c.l.b16 %v196
      %v285 = vpack.c.b16 %v282, %v281
      %v286 = vpack.c.b16 %v284, %v283
      %v290 = vsel %vm211, %v275, 0
      %v293 = vsel %vm211, %v276, 0
      %295 = vmatprep.subr.bf16.mxu0 0
      %296 = vmatpush1.bf16.msra.mxu0 %v285
      %297 = vmatprep.subr.bf16.mxu0 0
      %298 = vmatpush1.bf16.msra.mxu0 %v286
      %299 = vmatprep.subr.bf16.mxu0 0
      %300 = vmatpush1.bf16.msra.mxu0 0
      %301 = vmatprep.subr.bf16.mxu0 0
      %302 = vmatpush1.bf16.msra.mxu0 0
      %303 = vmatprep.subr.bf16.mxu0 0
      %304 = vmatpush1.bf16.msra.mxu0 0
      %305 = vmatprep.subr.bf16.mxu0 0
      %306 = vmatpush1.bf16.msra.mxu0 0
      %307 = vmatprep.subr.bf16.mxu0 0
      %308 = vmatpush1.bf16.msra.mxu0 0
      %309 = vmatprep.subr.bf16.mxu0 0
      %310 = vmatpush1.bf16.msra.mxu0 0
      %311 = vmatprep.subr.bf16.mxu0 0
      %312 = vmatpush1.bf16.msra.mxu0 0
      %313 = vmatprep.subr.bf16.mxu0 0
      %314 = vmatpush1.bf16.msra.mxu0 0
      %315 = vmatprep.subr.bf16.mxu0 0
      %316 = vmatpush1.bf16.msra.mxu0 0
      %317 = vmatprep.subr.bf16.mxu0 0
      %318 = vmatpush1.bf16.msra.mxu0 0
      %319 = vmatprep.subr.bf16.mxu0 0
      %320 = vmatpush1.bf16.msra.mxu0 0
      %321 = vmatprep.subr.bf16.mxu0 0
      %322 = vmatpush1.bf16.msra.mxu0 0
      %323 = vmatprep.subr.bf16.mxu0 0
      %324 = vmatpush1.bf16.msra.mxu0 0
      %325 = vmatprep.subr.bf16.mxu0 0
      %326 = vmatpush1.bf16.msra.mxu0 0
      %327 = vmatprep.mubr.bf16.mxu0 0
      %328 = vmatmul.mubr.bf16.gmra.mrb[0].mxu0 %v290
      %v329 = vpop.f32.mrb[0].mxu0
      %v330 = vadd.f32 %v253, %v329
      %v331 = vpop.f32.mrb[0].mxu0
      %v332 = vpop.f32.mrb[0].mxu0
      %v333 = vadd.f32 %v256, %v332
      %v334 = vpop.f32.mrb[0].mxu0
      %335 = vmatprep.mubr.bf16.mxu0 0
      %336 = vmatmul.mubr.bf16.gmra.mrb[0].mxu0 %v293
      %v337 = vpop.f32.mrb[0].mxu0
      %v338 = vadd.f32 %v261, %v337
      %v339 = vpop.f32.mrb[0].mxu0
      %v340 = vpop.f32.mrb[0].mxu0
      %v341 = vadd.f32 %v264, %v340
      %v342 = vpop.f32.mrb[0].mxu0
      %343 = vdwg.mxu0
      %v344 = vld [vmem:[%s5] sm:$0xff]
      %v345 = vld [vmem:[%s5 + $0x8] sm:$0xff]
      %v346 = vld [vmem:[%s5 + $0x10] sm:$0xff]
      %v347 = vld [vmem:[%s5 + $0x18] sm:$0xff]
      %349 = vset.pattern.permute.xlu0 0
      %350 = vperm.xlu0 %349, %v344
      %v351 = vpop.permute.xlu0 %350
      %354 = vset.pattern.permute.xlu0 0
      %355 = vperm.xlu0 %354, %v345
      %v356 = vpop.permute.xlu0 %355
      %359 = vset.pattern.permute.xlu0 0
      %360 = vperm.xlu0 %359, %v346
      %v361 = vpop.permute.xlu0 %360
      %364 = vset.pattern.permute.xlu0 0
      %365 = vperm.xlu0 %364, %v347
      %v366 = vpop.permute.xlu0 %365
      %v368 = vadd.f32 %v330, %v351
      %v369 = vadd.f32 %v333, %v356
      %v370 = vadd.f32 %v338, %v361
      %v371 = vadd.f32 %v341, %v366
      %v372 = vmax.f32 %v368, 0.0
      %v373 = vmax.f32 %v369, 0.0
      %v374 = vmax.f32 %v370, 0.0
      %v375 = vmax.f32 %v371, 0.0
      %v376 = vld [vmem:[%s6] sm:$0xf]
      %v377 = vld [vmem:[%s6 + $0x4] sm:$0xf]
      %v378 = vld [vmem:[%s6 + $0x8] sm:$0xf]
      %v379 = vld [vmem:[%s6 + $0xc] sm:$0xf]
      %v380 = vld [vmem:[%s6 + $0x10] sm:$0xf]
      %v381 = vld [vmem:[%s6 + $0x14] sm:$0xf]
      %v382 = vld [vmem:[%s6 + $0x18] sm:$0xf]
      %v383 = vld [vmem:[%s6 + $0x1c] sm:$0xf]
      %v384 = vld [vmem:[%s6 + $0x20] sm:$0xf]
      %v385 = vld [vmem:[%s6 + $0x24] sm:$0xf]
      %v386 = vld [vmem:[%s6 + $0x28] sm:$0xf]
      %v387 = vld [vmem:[%s6 + $0x2c] sm:$0xf]
      %v388 = vld [vmem:[%s6 + $0x30] sm:$0xf]
      %v389 = vld [vmem:[%s6 + $0x34] sm:$0xf]
      %v390 = vld [vmem:[%s6 + $0x38] sm:$0xf]
      %v391 = vld [vmem:[%s6 + $0x3c] sm:$0xf]
      %v392 = vpack.c.bf16 %v373, %v372
      %v393 = vpack.c.bf16 %v375, %v374
      %v394 = vld [vmem:[%s7] sm:$0xff]
      %v395 = vld [vmem:[%s7 + $0x8] sm:$0xff]
      %v396 = vld [vmem:[%s7 + $0x10] sm:$0xff]
      %v397 = vld [vmem:[%s7 + $0x18] sm:$0xff]
      %v398 = vld [vmem:[%s7 + $0x20] sm:$0xff]
      %v399 = vld [vmem:[%s7 + $0x28] sm:$0xff]
      %v400 = vld [vmem:[%s7 + $0x30] sm:$0xff]
      %v401 = vld [vmem:[%s7 + $0x38] sm:$0xff]
      %v402 = vld [vmem:[%s7 + $0x40] sm:$0xff]
      %v403 = vld [vmem:[%s7 + $0x48] sm:$0xff]
      %v404 = vld [vmem:[%s7 + $0x50] sm:$0xff]
      %v405 = vld [vmem:[%s7 + $0x58] sm:$0xff]
      %v406 = vld [vmem:[%s7 + $0x60] sm:$0xff]
      %v407 = vld [vmem:[%s7 + $0x68] sm:$0xff]
      %v408 = vld [vmem:[%s7 + $0x70] sm:$0xff]
      %v409 = vld [vmem:[%s7 + $0x78] sm:$0xff]
      %411 = vset.pattern.permute.xlu0 0
      %412 = vperm.xlu0 %411, %v394
      %v413 = vpop.permute.xlu0 %412
      %416 = vset.pattern.permute.xlu0 0
      %417 = vperm.xlu0 %416, %v395
      %v418 = vpop.permute.xlu0 %417
      %421 = vset.pattern.permute.xlu0 0
      %422 = vperm.xlu0 %421, %v396
      %v423 = vpop.permute.xlu0 %422
      %426 = vset.pattern.permute.xlu0 0
      %427 = vperm.xlu0 %426, %v397
      %v428 = vpop.permute.xlu0 %427
      %431 = vset.pattern.permute.xlu0 0
      %432 = vperm.xlu0 %431, %v398
      %v433 = vpop.permute.xlu0 %432
      %436 = vset.pattern.permute.xlu0 0
      %437 = vperm.xlu0 %436, %v399
      %v438 = vpop.permute.xlu0 %437
      %441 = vset.pattern.permute.xlu0 0
      %442 = vperm.xlu0 %441, %v400
      %v443 = vpop.permute.xlu0 %442
      %446 = vset.pattern.permute.xlu0 0
      %447 = vperm.xlu0 %446, %v401
      %v448 = vpop.permute.xlu0 %447
      %451 = vset.pattern.permute.xlu0 0
      %452 = vperm.xlu0 %451, %v402
      %v453 = vpop.permute.xlu0 %452
      %456 = vset.pattern.permute.xlu0 0
      %457 = vperm.xlu0 %456, %v403
      %v458 = vpop.permute.xlu0 %457
      %461 = vset.pattern.permute.xlu0 0
      %462 = vperm.xlu0 %461, %v404
      %v463 = vpop.permute.xlu0 %462
      %466 = vset.pattern.permute.xlu0 0
      %467 = vperm.xlu0 %466, %v405
      %v468 = vpop.permute.xlu0 %467
      %471 = vset.pattern.permute.xlu0 0
      %472 = vperm.xlu0 %471, %v406
      %v473 = vpop.permute.xlu0 %472
      %476 = vset.pattern.permute.xlu0 0
      %477 = vperm.xlu0 %476, %v407
      %v478 = vpop.permute.xlu0 %477
      %481 = vset.pattern.permute.xlu0 0
      %482 = vperm.xlu0 %481, %v408
      %v483 = vpop.permute.xlu0 %482
      %486 = vset.pattern.permute.xlu0 0
      %487 = vperm.xlu0 %486, %v409
      %v488 = vpop.permute.xlu0 %487
      %v506 = vunpack.c.l.b16 %v376
      %v507 = vunpack.c.l.b16 %v377
      %v508 = vunpack.c.l.b16 %v378
      %v509 = vunpack.c.l.b16 %v379
      %v510 = vunpack.c.l.b16 %v380
      %v511 = vunpack.c.l.b16 %v381
      %v512 = vunpack.c.l.b16 %v382
      %v513 = vunpack.c.l.b16 %v383
      %v514 = vunpack.c.l.b16 %v384
      %v515 = vunpack.c.l.b16 %v385
      %v516 = vunpack.c.l.b16 %v386
      %v517 = vunpack.c.l.b16 %v387
      %v518 = vunpack.c.l.b16 %v388
      %v519 = vunpack.c.l.b16 %v389
      %v520 = vunpack.c.l.b16 %v390
      %v521 = vunpack.c.l.b16 %v391
      %v522 = vpack.c.b16 %v507, %v506
      %v523 = vpack.c.b16 %v509, %v508
      %v524 = vpack.c.b16 %v511, %v510
      %v525 = vpack.c.b16 %v513, %v512
      %v526 = vpack.c.b16 %v515, %v514
      %v527 = vpack.c.b16 %v517, %v516
      %v528 = vpack.c.b16 %v519, %v518
      %v529 = vpack.c.b16 %v521, %v520
      %v531 = vsel %vm211, %v522, 0
      %v534 = vsel %vm211, %v523, 0
      %v537 = vsel %vm211, %v524, 0
      %v540 = vsel %vm211, %v525, 0
      %v543 = vsel %vm211, %v526, 0
      %v546 = vsel %vm211, %v527, 0
      %v549 = vsel %vm211, %v528, 0
      %v552 = vsel %vm211, %v529, 0
      %554 = vmatprep.subr.bf16.mxu0 0
      %555 = vmatpush1.bf16.msra.mxu0 %v392
      %556 = vmatprep.subr.bf16.mxu0 0
      %557 = vmatpush1.bf16.msra.mxu0 %v393
      %558 = vmatprep.subr.bf16.mxu0 0
      %559 = vmatpush1.bf16.msra.mxu0 0
      %560 = vmatprep.subr.bf16.mxu0 0
      %561 = vmatpush1.bf16.msra.mxu0 0
      %562 = vmatprep.subr.bf16.mxu0 0
      %563 = vmatpush1.bf16.msra.mxu0 0
      %564 = vmatprep.subr.bf16.mxu0 0
      %565 = vmatpush1.bf16.msra.mxu0 0
      %566 = vmatprep.subr.bf16.mxu0 0
      %567 = vmatpush1.bf16.msra.mxu0 0
      %568 = vmatprep.subr.bf16.mxu0 0
      %569 = vmatpush1.bf16.msra.mxu0 0
      %570 = vmatprep.subr.bf16.mxu0 0
      %571 = vmatpush1.bf16.msra.mxu0 0
      %572 = vmatprep.subr.bf16.mxu0 0
      %573 = vmatpush1.bf16.msra.mxu0 0
      %574 = vmatprep.subr.bf16.mxu0 0
      %575 = vmatpush1.bf16.msra.mxu0 0
      %576 = vmatprep.subr.bf16.mxu0 0
      %577 = vmatpush1.bf16.msra.mxu0 0
      %578 = vmatprep.subr.bf16.mxu0 0
      %579 = vmatpush1.bf16.msra.mxu0 0
      %580 = vmatprep.subr.bf16.mxu0 0
      %581 = vmatpush1.bf16.msra.mxu0 0
      %582 = vmatprep.subr.bf16.mxu0 0
      %583 = vmatpush1.bf16.msra.mxu0 0
      %584 = vmatprep.subr.bf16.mxu0 0
      %585 = vmatpush1.bf16.msra.mxu0 0
      %586 = vmatprep.mubr.bf16.mxu0 0
      %587 = vmatmul.mubr.bf16.gmra.mrb[0].mxu0 %v531
      %v588 = vpop.f32.mrb[0].mxu0
      %v589 = vadd.f32 %v413, %v588
      %v590 = vpop.f32.mrb[0].mxu0
      %v591 = vpop.f32.mrb[0].mxu0
      %v592 = vadd.f32 %v418, %v591
      %v593 = vpop.f32.mrb[0].mxu0
      %594 = vmatprep.mubr.bf16.mxu0 0
      %595 = vmatmul.mubr.bf16.gmra.mrb[0].mxu0 %v534
      %v596 = vpop.f32.mrb[0].mxu0
      %v597 = vadd.f32 %v423, %v596
      %v598 = vpop.f32.mrb[0].mxu0
      %v599 = vpop.f32.mrb[0].mxu0
      %v600 = vadd.f32 %v428, %v599
      %v601 = vpop.f32.mrb[0].mxu0
      %602 = vmatprep.mubr.bf16.mxu0 0
      %603 = vmatmul.mubr.bf16.gmra.mrb[0].mxu0 %v537
      %v604 = vpop.f32.mrb[0].mxu0
      %v605 = vadd.f32 %v433, %v604
      %v606 = vpop.f32.mrb[0].mxu0
      %v607 = vpop.f32.mrb[0].mxu0
      %v608 = vadd.f32 %v438, %v607
      %v609 = vpop.f32.mrb[0].mxu0
      %610 = vmatprep.mubr.bf16.mxu0 0
      %611 = vmatmul.mubr.bf16.gmra.mrb[0].mxu0 %v540
      %v612 = vpop.f32.mrb[0].mxu0
      %v613 = vadd.f32 %v443, %v612
      %v614 = vpop.f32.mrb[0].mxu0
      %v615 = vpop.f32.mrb[0].mxu0
      %v616 = vadd.f32 %v448, %v615
      %v617 = vpop.f32.mrb[0].mxu0
      %618 = vmatprep.mubr.bf16.mxu0 0
      %619 = vmatmul.mubr.bf16.gmra.mrb[0].mxu0 %v543
      %v620 = vpop.f32.mrb[0].mxu0
      %v621 = vadd.f32 %v453, %v620
      %v622 = vpop.f32.mrb[0].mxu0
      %v623 = vpop.f32.mrb[0].mxu0
      %v624 = vadd.f32 %v458, %v623
      %v625 = vpop.f32.mrb[0].mxu0
      %626 = vmatprep.mubr.bf16.mxu0 0
      %627 = vmatmul.mubr.bf16.gmra.mrb[0].mxu0 %v546
      %v628 = vpop.f32.mrb[0].mxu0
      %v629 = vadd.f32 %v463, %v628
      %v630 = vpop.f32.mrb[0].mxu0
      %v631 = vpop.f32.mrb[0].mxu0
      %v632 = vadd.f32 %v468, %v631
      %v633 = vpop.f32.mrb[0].mxu0
      %634 = vmatprep.mubr.bf16.mxu0 0
      %635 = vmatmul.mubr.bf16.gmra.mrb[0].mxu0 %v549
      %v636 = vpop.f32.mrb[0].mxu0
      %v637 = vadd.f32 %v473, %v636
      %v638 = vpop.f32.mrb[0].mxu0
      %v639 = vpop.f32.mrb[0].mxu0
      %v640 = vadd.f32 %v478, %v639
      %v641 = vpop.f32.mrb[0].mxu0
      %642 = vmatprep.mubr.bf16.mxu0 0
      %643 = vmatmul.mubr.bf16.gmra.mrb[0].mxu0 %v552
      %v644 = vpop.f32.mrb[0].mxu0
      %v645 = vadd.f32 %v483, %v644
      %v646 = vpop.f32.mrb[0].mxu0
      %v647 = vpop.f32.mrb[0].mxu0
      %v648 = vadd.f32 %v488, %v647
      %v649 = vpop.f32.mrb[0].mxu0
      %650 = vdwg.mxu0
      %v651 = vmax.f32 %v589, %v605
      %v652 = vmax.f32 %v592, %v608
      %v653 = vmax.f32 %v597, %v613
      %v654 = vmax.f32 %v600, %v616
      %v655 = vmax.f32 %v651, %v621
      %v656 = vmax.f32 %v652, %v624
      %v657 = vmax.f32 %v653, %v629
      %v658 = vmax.f32 %v654, %v632
      %v659 = vmax.f32 %v655, %v637
      %v660 = vmax.f32 %v656, %v640
      %v661 = vmax.f32 %v657, %v645
      %v662 = vmax.f32 %v658, %v648
      %v663 = vmax.f32 %v659, %v660
      %v664 = vmax.f32 %v661, %v662
      %v665 = vmax.f32 %v663, %v664
      %v666 = vrot.slane %v665, 4
      %v667 = vmax.f32 %v665, %v666
      %v668 = vrot.slane %v667, 2
      %v669 = vmax.f32 %v667, %v668
      %v670 = vrot.slane %v669, 1
      %v671 = vmax.f32 %v669, %v670
      %v672 = vsub.f32 %v589, %v671
      %v673 = vsub.f32 %v592, %v671
      %v674 = vsub.f32 %v597, %v671
      %v675 = vsub.f32 %v600, %v671
      %v676 = vsub.f32 %v605, %v671
      %v677 = vsub.f32 %v608, %v671
      %v678 = vsub.f32 %v613, %v671
      %v679 = vsub.f32 %v616, %v671
      %v680 = vsub.f32 %v621, %v671
      %v681 = vsub.f32 %v624, %v671
      %v682 = vsub.f32 %v629, %v671
      %v683 = vsub.f32 %v632, %v671
      %v684 = vsub.f32 %v637, %v671
      %v685 = vsub.f32 %v640, %v671
      %v686 = vsub.f32 %v645, %v671
      %v687 = vsub.f32 %v648, %v671
      %v688 = vmul.f32 %v672, 1.442695
      %v689 = vpow.pop %v688
      %v690 = vmul.f32 %v673, 1.442695
      %v691 = vpow.pop %v690
      %v692 = vmul.f32 %v674, 1.442695
      %v693 = vpow.pop %v692
      %v694 = vmul.f32 %v675, 1.442695
      %v695 = vpow.pop %v694
      %v696 = vmul.f32 %v676, 1.442695
      %v697 = vpow.pop %v696
      %v698 = vmul.f32 %v677, 1.442695
      %v699 = vpow.pop %v698
      %v700 = vmul.f32 %v678, 1.442695
      %v701 = vpow.pop %v700
      %v702 = vmul.f32 %v679, 1.442695
      %v703 = vpow.pop %v702
      %v704 = vmul.f32 %v680, 1.442695
      %v705 = vpow.pop %v704
      %v706 = vmul.f32 %v681, 1.442695
      %v707 = vpow.pop %v706
      %v708 = vmul.f32 %v682, 1.442695
      %v709 = vpow.pop %v708
      %v710 = vmul.f32 %v683, 1.442695
      %v711 = vpow.pop %v710
      %v712 = vmul.f32 %v684, 1.442695
      %v713 = vpow.pop %v712
      %v714 = vmul.f32 %v685, 1.442695
      %v715 = vpow.pop %v714
      %v716 = vmul.f32 %v686, 1.442695
      %v717 = vpow.pop %v716
      %v718 = vmul.f32 %v687, 1.442695
      %v719 = vpow.pop %v718
      %v720 = vadd.f32 %v689, %v691
      %v721 = vadd.f32 %v720, %v693
      %v722 = vadd.f32 %v721, %v695
      %v723 = vadd.f32 %v722, %v697
      %v724 = vadd.f32 %v723, %v699
      %v725 = vadd.f32 %v724, %v701
      %v726 = vadd.f32 %v725, %v703
      %v727 = vadd.f32 %v726, %v705
      %v728 = vadd.f32 %v727, %v707
      %v729 = vadd.f32 %v728, %v709
      %v730 = vadd.f32 %v729, %v711
      %v731 = vadd.f32 %v730, %v713
      %v732 = vadd.f32 %v731, %v715
      %v733 = vadd.f32 %v732, %v717
      %v734 = vadd.f32 %v733, %v719
      %v735 = vrot.slane %v734, 4
      %v736 = vadd.f32 %v734, %v735
      %v737 = vrot.slane %v736, 2
      %v738 = vadd.f32 %v736, %v737
      %v739 = vrot.slane %v738, 1
      %v740 = vadd.f32 %v738, %v739
      %v741 = vlog2.pop %v740
      %v742 = vmul.f32 %v741, 0.6931472
      %v743 = vsub.f32 %v672, %v742
      %v744 = vsub.f32 %v673, %v742
      %v745 = vsub.f32 %v674, %v742
      %v746 = vsub.f32 %v675, %v742
      %v747 = vsub.f32 %v676, %v742
      %v748 = vsub.f32 %v677, %v742
      %v749 = vsub.f32 %v678, %v742
      %v750 = vsub.f32 %v679, %v742
      %v751 = vsub.f32 %v680, %v742
      %v752 = vsub.f32 %v681, %v742
      %v753 = vsub.f32 %v682, %v742
      %v754 = vsub.f32 %v683, %v742
      %v755 = vsub.f32 %v684, %v742
      %v756 = vsub.f32 %v685, %v742
      %v757 = vsub.f32 %v686, %v742
      %v758 = vsub.f32 %v687, %v742
      %759 = vst [vmem:[#allocation3] sm:$0xff] %v743
      %760 = vst [vmem:[#allocation3 + $0x8] sm:$0xff] %v744
      %761 = vst [vmem:[#allocation3 + $0x10] sm:$0xff] %v745
      %762 = vst [vmem:[#allocation3 + $0x18] sm:$0xff] %v746
      %763 = vst [vmem:[#allocation3 + $0x20] sm:$0xff] %v747
      %764 = vst [vmem:[#allocation3 + $0x28] sm:$0xff] %v748
      %765 = vst [vmem:[#allocation3 + $0x30] sm:$0xff] %v749
      %766 = vst [vmem:[#allocation3 + $0x38] sm:$0xff] %v750
      %767 = vst [vmem:[#allocation3 + $0x40] sm:$0xff] %v751
      %768 = vst [vmem:[#allocation3 + $0x48] sm:$0xff] %v752
      %769 = vst [vmem:[#allocation3 + $0x50] sm:$0xff] %v753
      %770 = vst [vmem:[#allocation3 + $0x58] sm:$0xff] %v754
      %771 = vst [vmem:[#allocation3 + $0x60] sm:$0xff] %v755
      %772 = vst [vmem:[#allocation3 + $0x68] sm:$0xff] %v756
      %773 = vst [vmem:[#allocation3 + $0x70] sm:$0xff] %v757
      %774 = vst [vmem:[#allocation3 + $0x78] sm:$0xff] %v758
    $region41: #{tpu_custom_call.1} parent=1 // pred_fallthru
      _
    // Predicated region
    $region42: #{tpu_custom_call.1} parent=1 // pred_check
      _
    $region43: #{tpu_custom_call.1} parent=1 // pred_check_branch
      %776 = sbr.rel (0) target = $region45
    $region44: #{tpu_custom_call.1} parent=1 // pred_region
      %s778 = ssub.s32 2048, 2048
      %779 = vsyncadd [#allocation4], %s778
      %s780 = sshll.u32 [#allocation3], 4
      %s781 = int_to_ptr.vmem [resolvable:$true] %s780
      %786 = dma.vmem_to_hbm [thread:$0]  %s781, 2048, %s8, [#allocation4], 128, 128, 8
    $region45: #{tpu_custom_call.1} parent=1 // pred_fallthru
      _
    // Predicated region
    $region46: #{tpu_custom_call.1} parent=1 // pred_check
      _
    $region47: #{tpu_custom_call.1} parent=1 // pred_check_branch
      %788 = sbr.rel (0) target = $region49
    $region48: #{tpu_custom_call.1} parent=1 // pred_region
      %789 = dma.done [#allocation4], 2048
    $region49: #{tpu_custom_call.1} parent=1 // pred_fallthru
      _
    %790 = vsyncpa [#allocation4], 1

</llo_original>
